<compile_context>
chip_gen: v6e
topology: v6e:2x2x1
jax: 0.10.0
libtpu: 0.0.40
codegen_flags: <defaults>
</compile_context>

<pallas_src>
import jax
import jax.numpy as jnp
from jax.experimental import pallas as pl
from jax.experimental.pallas import tpu as pltpu


def _round_up(x: int, m: int) -> int:
    return ((x + m - 1) // m) * m


def _action_prediction_kernel(x_ref, w1_ref, b1_ref, w2_ref, b2_ref, out_ref):
    # Hidden layer: Linear on the MXU with f32 accumulation, bias + ReLU in f32.
    h = jnp.dot(x_ref[...], w1_ref[...], preferred_element_type=jnp.float32)
    h = jnp.maximum(h + b1_ref[...].astype(jnp.float32), 0.0)   # (TB,K)+(1,K)
    # Output layer: cast activations back to the MXU input dtype (no-op for
    # f32; deliberate narrow cast for a bf16 caller), keep f32 accumulation.
    o = jnp.dot(h.astype(w2_ref.dtype), w2_ref[...],
                preferred_element_type=jnp.float32)
    o = o + b2_ref[...].astype(jnp.float32)                      # (TB,N)+(1,N)
    out_ref[...] = o.astype(out_ref.dtype)


def _pick_batch_tile(B: int, batch_tile: int, sublane: int) -> int:
    """Sublane-aligned batch tile; keep >=2 grid steps when B allows (v7x TCs)."""
    Bp = _round_up(B, sublane)
    if Bp <= sublane:
        return Bp
    half = _round_up(pl.cdiv(Bp, 2), sublane)     # cap -> grid has >= 2 steps
    return max(sublane, min(_round_up(batch_tile, sublane), half))


def action_prediction_forward(rnn_out, w1, b1, w2, b2, *, batch_tile=2048):
    """2-layer MLP of ActionPrediction in a single Pallas kernel.

    rnn_out: (B, rnn_size)
    w1: (rnn_size, rnn_size), b1: (rnn_size,)  (weights pre-transposed to (in, out))
    w2: (rnn_size, out_size), b2: (out_size,)
    returns: (B, out_size) in rnn_out.dtype (f32 accumulation inside).
    """
    B, rnn_size = rnn_out.shape
    out_size = w2.shape[1]
    dtype = rnn_out.dtype

    # bf16 packs 16 rows per vreg; f32 packs 8.
    sublane = 16 if jnp.dtype(dtype) == jnp.dtype(jnp.bfloat16) else 8
    TB = _pick_batch_tile(B, batch_tile, sublane)
    grid = (pl.cdiv(B, TB),)

    # Biases as (1, K) rows so they broadcast over the batch tile. No padding.
    b1_2d = b1.reshape(1, rnn_size)
    b2_2d = b2.reshape(1, out_size)

    itemsize = jnp.dtype(dtype).itemsize
    cost = pl.CostEstimate(
        flops=2 * B * rnn_size * rnn_size + 2 * B * rnn_size * out_size,
        transcendentals=0,
        bytes_accessed=(B * rnn_size + rnn_size * rnn_size + rnn_size
                        + rnn_size * out_size + out_size
                        + B * out_size) * itemsize,
    )

    return pl.pallas_call(
        _action_prediction_kernel,
        out_shape=jax.ShapeDtypeStruct((B, out_size), dtype),
        grid=grid,
        in_specs=[
            # Activations: tiled over batch, full (unpadded) feature dim.
            pl.BlockSpec((TB, rnn_size), lambda i: (i, 0)),
            # Weights / biases: block (0,0) every step -> resident in VMEM.
            pl.BlockSpec((rnn_size, rnn_size), lambda i: (0, 0)),
            pl.BlockSpec((1, rnn_size), lambda i: (0, 0)),
            pl.BlockSpec((rnn_size, out_size), lambda i: (0, 0)),
            pl.BlockSpec((1, out_size), lambda i: (0, 0)),
        ],
        out_specs=pl.BlockSpec((TB, out_size), lambda i: (i, 0)),
        compiler_params=pltpu.CompilerParams(
            dimension_semantics=("parallel",),   # shard batch grid over TCs (v7x)
        ),
        cost_estimate=cost,
    )(rnn_out, w1, b1_2d, w2, b2_2d)


def reference_forward(rnn_out, w1, b1, w2, b2):
    h = jnp.maximum(rnn_out @ w1 + b1, 0.0)
    return h @ w2 + b2


if __name__ == "__main__":
    # Small shapes consistent with the module: batch=8, rnn_size=32, out_size=4.
    B, rnn_size, out_size = 8, 32, 4

    key = jax.random.PRNGKey(0)
    k_x, k_w1, k_b1, k_w2, k_b2 = jax.random.split(key, 5)

    rnn_out = jax.random.normal(k_x, (B, rnn_size), dtype=jnp.float32)

    # Deterministic parameter init (Linear-like scale), stored as (in, out)
    # (PyTorch nn.Linear stores (out, in) and does x @ W.T — pre-transposed here).
    w1 = jax.random.normal(k_w1, (rnn_size, rnn_size), jnp.float32) / jnp.sqrt(rnn_size)
    b1 = jax.random.normal(k_b1, (rnn_size,), jnp.float32) * 0.01
    w2 = jax.random.normal(k_w2, (rnn_size, out_size), jnp.float32) / jnp.sqrt(rnn_size)
    b2 = jax.random.normal(k_b2, (out_size,), jnp.float32) * 0.01

    # Unused forward() args (observations, prev_actions, masks, perception_embed,
    # target_encoding) are omitted — they do not contribute to the output.
    out = action_prediction_forward(rnn_out, w1, b1, w2, b2)
    out = jax.block_until_ready(out)

    ref = reference_forward(rnn_out, w1, b1, w2, b2)
    assert out.shape == (B, out_size)
    assert jnp.allclose(out, ref, atol=1e-5, rtol=1e-5), "mismatch vs reference"

    # TODO(synk): calc_loss (CrossEntropyLoss / Accuracy) is training-only glue,
    # not part of forward(); not implemented as a kernel.
    print("KERNEL_OK")
</pallas_src>

<mosaic_0001>
module attributes {stable_mosaic.version = 11 : i64} {
  func.func @_action_prediction_kernel(%arg0: i32, %arg1: memref<8x32xf32, #tpu.memory_space<vmem>>, %arg2: memref<32x32xf32, #tpu.memory_space<vmem>>, %arg3: memref<1x32xf32, #tpu.memory_space<vmem>>, %arg4: memref<32x4xf32, #tpu.memory_space<vmem>>, %arg5: memref<1x4xf32, #tpu.memory_space<vmem>>, %arg6: memref<8x4xf32, #tpu.memory_space<vmem>>) attributes {dimension_semantics = [#tpu.dimension_semantics<parallel>], iteration_bounds = array<i64: 1>, scalar_prefetch = 0 : i64, scratch_operands = 0 : i64, tpu.core_type = #tpu.core_type<tc>, window_params = [{transform_indices = @transform_0, window_bounds = array<i64: 8, 32>}, {pipeline_mode = #tpu.pipeline_mode<synchronous>, transform_indices = @transform_1, window_bounds = array<i64: 32, 32>}, {pipeline_mode = #tpu.pipeline_mode<synchronous>, transform_indices = @transform_2, window_bounds = array<i64: 1, 32>}, {pipeline_mode = #tpu.pipeline_mode<synchronous>, transform_indices = @transform_3, window_bounds = array<i64: 32, 4>}, {pipeline_mode = #tpu.pipeline_mode<synchronous>, transform_indices = @transform_4, window_bounds = array<i64: 1, 4>}, {transform_indices = @transform_5, window_bounds = array<i64: 8, 4>}]} {
    %c0 = arith.constant 0 : index
    %c0_0 = arith.constant 0 : index
    %0 = vector.load %arg1[%c0, %c0_0] : memref<8x32xf32, #tpu.memory_space<vmem>>, vector<8x32xf32>
    %c0_1 = arith.constant 0 : index
    %c0_2 = arith.constant 0 : index
    %1 = vector.load %arg2[%c0_1, %c0_2] : memref<32x32xf32, #tpu.memory_space<vmem>>, vector<32x32xf32>
    %cst = arith.constant dense<0.000000e+00> : vector<8x32xf32>
    %2 = tpu.matmul %0, %1, %cst {dimension_numbers = #tpu.dot_dimension_numbers<[1], [0], [0], [1], [0, 0, 1, 1], [], []>} : vector<8x32xf32>, vector<32x32xf32>, vector<8x32xf32> -> vector<8x32xf32>
    %c0_3 = arith.constant 0 : index
    %c0_4 = arith.constant 0 : index
    %3 = vector.load %arg3[%c0_3, %c0_4] : memref<1x32xf32, #tpu.memory_space<vmem>>, vector<1x32xf32>
    %4 = vector.broadcast %3 : vector<1x32xf32> to vector<8x32xf32>
    %5 = arith.addf %2, %4 : vector<8x32xf32>
    %cst_5 = arith.constant 0.000000e+00 : f32
    %6 = vector.broadcast %cst_5 : f32 to vector<8x32xf32>
    %7 = arith.maximumf %5, %6 : vector<8x32xf32>
    %c0_6 = arith.constant 0 : index
    %c0_7 = arith.constant 0 : index
    %8 = vector.load %arg4[%c0_6, %c0_7] : memref<32x4xf32, #tpu.memory_space<vmem>>, vector<32x4xf32>
    %cst_8 = arith.constant dense<0.000000e+00> : vector<8x4xf32>
    %9 = tpu.matmul %7, %8, %cst_8 {dimension_numbers = #tpu.dot_dimension_numbers<[1], [0], [0], [1], [0, 0, 1, 1], [], []>} : vector<8x32xf32>, vector<32x4xf32>, vector<8x4xf32> -> vector<8x4xf32>
    %c0_9 = arith.constant 0 : index
    %c0_10 = arith.constant 0 : index
    %10 = vector.load %arg5[%c0_9, %c0_10] : memref<1x4xf32, #tpu.memory_space<vmem>>, vector<1x4xf32>
    %11 = vector.broadcast %10 : vector<1x4xf32> to vector<8x4xf32>
    %12 = arith.addf %9, %11 : vector<8x4xf32>
    %c0_11 = arith.constant 0 : index
    %c0_12 = arith.constant 0 : index
    %13 = vector.load %arg6[%c0_11, %c0_12] : memref<8x4xf32, #tpu.memory_space<vmem>>, vector<8x4xf32>
    tpu.vector_store %arg6[%c0_11, %c0_12], %12 {strides = array<i32>} : memref<8x4xf32, #tpu.memory_space<vmem>>, vector<8x4xf32>,
    return
  }
  func.func @transform_0(%arg0: i32) -> (i32, i32) {
    %c0_i32 = arith.constant 0 : i32
    %c0_i32_0 = arith.constant 0 : i32
    return %arg0, %c0_i32 : i32, i32
  }
  func.func @transform_1(%arg0: i32) -> (i32, i32) {
    %c0_i32 = arith.constant 0 : i32
    %c0_i32_0 = arith.constant 0 : i32
    %c0_i32_1 = arith.constant 0 : i32
    return %c0_i32, %c0_i32_0 : i32, i32
  }
  func.func @transform_2(%arg0: i32) -> (i32, i32) {
    %c0_i32 = arith.constant 0 : i32
    %c0_i32_0 = arith.constant 0 : i32
    %c0_i32_1 = arith.constant 0 : i32
    return %c0_i32, %c0_i32_0 : i32, i32
  }
  func.func @transform_3(%arg0: i32) -> (i32, i32) {
    %c0_i32 = arith.constant 0 : i32
    %c0_i32_0 = arith.constant 0 : i32
    %c0_i32_1 = arith.constant 0 : i32
    return %c0_i32, %c0_i32_0 : i32, i32
  }
  func.func @transform_4(%arg0: i32) -> (i32, i32) {
    %c0_i32 = arith.constant 0 : i32
    %c0_i32_0 = arith.constant 0 : i32
    %c0_i32_1 = arith.constant 0 : i32
    return %c0_i32, %c0_i32_0 : i32, i32
  }
  func.func @transform_5(%arg0: i32) -> (i32, i32) {
    %c0_i32 = arith.constant 0 : i32
    %c0_i32_0 = arith.constant 0 : i32
    return %arg0, %c0_i32 : i32, i32
  }
}

</mosaic_0001>

<llo_original>
// kernel: tpu_custom_call.1
$region0: #{tpu_custom_call.1}
  #allocation0 [shape = 'u32[]', space=smem, size = 0x4, offset = 0x4, fixed_abs, tag = 'smem constant byte address 0x4 - core index']
  #allocation1 [shape = 'u32[144,128]{1,0:T(1,128)}', space=vmem, size = 0x12000, scoped, tag = 'internal scratch']
  %s0 = inlined_call_operand.hbm [shape: f32[8,32], index: 0, kind: input, shape index: {}]
  %s1 = inlined_call_operand.vmem [shape: f32[32,32], index: 1, kind: input, shape index: {}]
  %s2 = inlined_call_operand.vmem [shape: f32[1,32], index: 2, kind: input, shape index: {}]
  %s3 = inlined_call_operand.vmem [shape: f32[32,4], index: 3, kind: input, shape index: {}]
  %s4 = inlined_call_operand.vmem [shape: f32[1,4], index: 4, kind: input, shape index: {}]
  %s5 = inlined_call_operand.vmem [shape: f32[8,4], index: 5, kind: output, shape index: {}]
  %s6 = sld [smem:[#allocation0]]
  $region34: #{tpu_custom_call.1} parent=0
    _
  %s8 = ssub.s32 1, %s6
  %s9 = scalar_select 0, %s8, %s6
  $region1: #{tpu_custom_call.1} parent=0
    #allocation2 [shape = 'u8[4096]{0}', space=vmem, size = 0x1000, scoped, tag = 'input window, operand 0, single buffered']
    #allocation3 [shape = 's32[1]{0}', space=sflag, size = 0x4, scoped, tag = 'scoped memory for tpu_custom_call.1']
    %10 = vsyncpa [#allocation3], 0
    // Predicated region
    $region2: #{tpu_custom_call.1} parent=1 // pred_check
      _
    $region3: #{tpu_custom_call.1} parent=1 // pred_check_branch
      %12 = sbr.rel (0) target = $region5
    $region4: #{tpu_custom_call.1} parent=1 // pred_region
      %s14 = ssub.s32 128, 128
      %15 = vsyncadd [#allocation3], %s14
      %s17 = sshll.u32 [#allocation2], 4
      %s18 = int_to_ptr.vmem [resolvable:$true] %s17
      %20 = dma.hbm_to_vmem [thread:$0]  %s0, 128, %s18, [#allocation3]
    $region5: #{tpu_custom_call.1} parent=1 // pred_fallthru
      _
    // Predicated region
    $region6: #{tpu_custom_call.1} parent=1 // pred_check
      _
    $region7: #{tpu_custom_call.1} parent=1 // pred_check_branch
      %22 = sbr.rel (0) target = $region9
    $region8: #{tpu_custom_call.1} parent=1 // pred_region
      _
    $region9: #{tpu_custom_call.1} parent=1 // pred_fallthru
      _
    // Predicated region
    $region10: #{tpu_custom_call.1} parent=1 // pred_check
      _
    $region11: #{tpu_custom_call.1} parent=1 // pred_check_branch
      %24 = sbr.rel (0) target = $region13
    $region12: #{tpu_custom_call.1} parent=1 // pred_region
      _
    $region13: #{tpu_custom_call.1} parent=1 // pred_fallthru
      _
    // Predicated region
    $region14: #{tpu_custom_call.1} parent=1 // pred_check
      _
    $region15: #{tpu_custom_call.1} parent=1 // pred_check_branch
      %26 = sbr.rel (0) target = $region17
    $region16: #{tpu_custom_call.1} parent=1 // pred_region
      _
    $region17: #{tpu_custom_call.1} parent=1 // pred_fallthru
      _
    // Predicated region
    $region18: #{tpu_custom_call.1} parent=1 // pred_check
      _
    $region19: #{tpu_custom_call.1} parent=1 // pred_check_branch
      %28 = sbr.rel (0) target = $region21
    $region20: #{tpu_custom_call.1} parent=1 // pred_region
      _
    $region21: #{tpu_custom_call.1} parent=1 // pred_fallthru
      _
    // Predicated region
    $region22: #{tpu_custom_call.1} parent=1 // pred_check
      _
    $region23: #{tpu_custom_call.1} parent=1 // pred_check_branch
      %30 = sbr.rel (0) target = $region25
    $region24: #{tpu_custom_call.1} parent=1 // pred_region
      %31 = dma.done [#allocation3], 128
    $region25: #{tpu_custom_call.1} parent=1 // pred_fallthru
      _
    %v32 = vld [vmem:[#allocation2] sm:$0xff]
    %v33 = vld [vmem:[%s1] sm:$0xff]
    %v34 = vld [vmem:[%s1 + $0x8] sm:$0xff]
    %v35 = vld [vmem:[%s1 + $0x10] sm:$0xff]
    %v36 = vld [vmem:[%s1 + $0x18] sm:$0xff]
    %v37 = vld [vmem:[%s2] sm:$0x1]
    %v39 = vlaneseq
    %v40 = vshrl.u32 %v39, 7
    %v41 = vsub.s32 0, %v40
    %v42 = vrot.slane %v37, %v41
    %vm44 = vcmask 261120
    %v46 = vsel %vm44, %v32, 0
    %48 = vmatprep.subr.mxu0 0.0
    %49 = vmatpush1.msra.mxu0 0.0
    %50 = vmatprep.subr.mxu0 0.0
    %51 = vmatpush1.msra.mxu0 0.0
    %52 = vmatprep.subr.mxu0 0.0
    %53 = vmatpush1.msra.mxu0 0.0
    %54 = vmatprep.subr.mxu0 0.0
    %55 = vmatpush1.msra.mxu0 0.0
    %56 = vmatprep.subr.mxu0 0.0
    %57 = vmatpush1.msra.mxu0 0.0
    %58 = vmatprep.subr.mxu0 0.0
    %59 = vmatpush1.msra.mxu0 0.0
    %60 = vmatprep.subr.mxu0 0.0
    %61 = vmatpush1.msra.mxu0 0.0
    %62 = vmatprep.subr.mxu0 0.0
    %63 = vmatpush1.msra.mxu0 0.0
    %64 = vmatprep.subr.mxu0 0.0
    %65 = vmatpush1.msra.mxu0 0.0
    %66 = vmatprep.subr.mxu0 0.0
    %67 = vmatpush1.msra.mxu0 0.0
    %68 = vmatprep.subr.mxu0 0.0
    %69 = vmatpush1.msra.mxu0 0.0
    %70 = vmatprep.subr.mxu0 0.0
    %71 = vmatpush1.msra.mxu0 0.0
    %72 = vmatprep.subr.mxu0 0.0
    %73 = vmatpush1.msra.mxu0 %v36
    %74 = vmatprep.subr.mxu0 0.0
    %75 = vmatpush1.msra.mxu0 %v35
    %76 = vmatprep.subr.mxu0 0.0
    %77 = vmatpush1.msra.mxu0 %v34
    %78 = vmatprep.subr.mxu0 0.0
    %79 = vmatpush1.msra.mxu0 %v33
    %80 = vmatprep.subr.mxu0 0.0
    %81 = vmatpush2.msra.mxu0 0.0
    %82 = vmatprep.subr.mxu0 0.0
    %83 = vmatpush2.msra.mxu0 0.0
    %84 = vmatprep.subr.mxu0 0.0
    %85 = vmatpush2.msra.mxu0 0.0
    %86 = vmatprep.subr.mxu0 0.0
    %87 = vmatpush2.msra.mxu0 0.0
    %88 = vmatprep.subr.mxu0 0.0
    %89 = vmatpush2.msra.mxu0 0.0
    %90 = vmatprep.subr.mxu0 0.0
    %91 = vmatpush2.msra.mxu0 0.0
    %92 = vmatprep.subr.mxu0 0.0
    %93 = vmatpush2.msra.mxu0 0.0
    %94 = vmatprep.subr.mxu0 0.0
    %95 = vmatpush2.msra.mxu0 0.0
    %96 = vmatprep.subr.mxu0 0.0
    %97 = vmatpush2.msra.mxu0 0.0
    %98 = vmatprep.subr.mxu0 0.0
    %99 = vmatpush2.msra.mxu0 0.0
    %100 = vmatprep.subr.mxu0 0.0
    %101 = vmatpush2.msra.mxu0 0.0
    %102 = vmatprep.subr.mxu0 0.0
    %103 = vmatpush2.msra.mxu0 0.0
    %104 = vmatprep.subr.mxu0 0.0
    %105 = vmatpush2.msra.mxu0 0.0
    %106 = vmatprep.subr.mxu0 0.0
    %107 = vmatpush2.msra.mxu0 0.0
    %108 = vmatprep.subr.mxu0 0.0
    %109 = vmatpush2.msra.mxu0 0.0
    %110 = vmatprep.subr.mxu0 0.0
    %111 = vmatpush2.msra.mxu0 0.0
    %112 = vmatprep.mubr.f32.mxu0 0.0
    %113 = vmatmul.mubr.f32.gmra.mxu0 %v46
    %v114 = vpop.f32.mrf.mxu0
    %v115 = vadd.f32 %v42, %v114
    %v116 = vpop.f32.mrf.mxu0
    %117 = vdwg.mxu0
    %v118 = vmax.f32 %v115, 0.0
    %v119 = vld [vmem:[%s3] sm:$0xff]
    %v120 = vld [vmem:[%s3 + $0x8] sm:$0xff]
    %v121 = vld [vmem:[%s3 + $0x10] sm:$0xff]
    %v122 = vld [vmem:[%s3 + $0x18] sm:$0xff]
    %v123 = vld [vmem:[%s4] sm:$0x1]
    %v125 = vlaneseq
    %v126 = vshrl.u32 %v125, 7
    %v127 = vsub.s32 0, %v126
    %v128 = vrot.slane %v123, %v127
    %v131 = vsel %vm44, %v118, 0
    %133 = vmatprep.subr.mxu0 0.0
    %134 = vmatpush1.msra.mxu0 0.0
    %135 = vmatprep.subr.mxu0 0.0
    %136 = vmatpush1.msra.mxu0 0.0
    %137 = vmatprep.subr.mxu0 0.0
    %138 = vmatpush1.msra.mxu0 0.0
    %139 = vmatprep.subr.mxu0 0.0
    %140 = vmatpush1.msra.mxu0 0.0
    %141 = vmatprep.subr.mxu0 0.0
    %142 = vmatpush1.msra.mxu0 0.0
    %143 = vmatprep.subr.mxu0 0.0
    %144 = vmatpush1.msra.mxu0 0.0
    %145 = vmatprep.subr.mxu0 0.0
    %146 = vmatpush1.msra.mxu0 0.0
    %147 = vmatprep.subr.mxu0 0.0
    %148 = vmatpush1.msra.mxu0 0.0
    %149 = vmatprep.subr.mxu0 0.0
    %150 = vmatpush1.msra.mxu0 0.0
    %151 = vmatprep.subr.mxu0 0.0
    %152 = vmatpush1.msra.mxu0 0.0
    %153 = vmatprep.subr.mxu0 0.0
    %154 = vmatpush1.msra.mxu0 0.0
    %155 = vmatprep.subr.mxu0 0.0
    %156 = vmatpush1.msra.mxu0 0.0
    %157 = vmatprep.subr.mxu0 0.0
    %158 = vmatpush1.msra.mxu0 %v122
    %159 = vmatprep.subr.mxu0 0.0
    %160 = vmatpush1.msra.mxu0 %v121
    %161 = vmatprep.subr.mxu0 0.0
    %162 = vmatpush1.msra.mxu0 %v120
    %163 = vmatprep.subr.mxu0 0.0
    %164 = vmatpush1.msra.mxu0 %v119
    %165 = vmatprep.subr.mxu0 0.0
    %166 = vmatpush2.msra.mxu0 0.0
    %167 = vmatprep.subr.mxu0 0.0
    %168 = vmatpush2.msra.mxu0 0.0
    %169 = vmatprep.subr.mxu0 0.0
    %170 = vmatpush2.msra.mxu0 0.0
    %171 = vmatprep.subr.mxu0 0.0
    %172 = vmatpush2.msra.mxu0 0.0
    %173 = vmatprep.subr.mxu0 0.0
    %174 = vmatpush2.msra.mxu0 0.0
    %175 = vmatprep.subr.mxu0 0.0
    %176 = vmatpush2.msra.mxu0 0.0
    %177 = vmatprep.subr.mxu0 0.0
    %178 = vmatpush2.msra.mxu0 0.0
    %179 = vmatprep.subr.mxu0 0.0
    %180 = vmatpush2.msra.mxu0 0.0
    %181 = vmatprep.subr.mxu0 0.0
    %182 = vmatpush2.msra.mxu0 0.0
    %183 = vmatprep.subr.mxu0 0.0
    %184 = vmatpush2.msra.mxu0 0.0
    %185 = vmatprep.subr.mxu0 0.0
    %186 = vmatpush2.msra.mxu0 0.0
    %187 = vmatprep.subr.mxu0 0.0
    %188 = vmatpush2.msra.mxu0 0.0
    %189 = vmatprep.subr.mxu0 0.0
    %190 = vmatpush2.msra.mxu0 0.0
    %191 = vmatprep.subr.mxu0 0.0
    %192 = vmatpush2.msra.mxu0 0.0
    %193 = vmatprep.subr.mxu0 0.0
    %194 = vmatpush2.msra.mxu0 0.0
    %195 = vmatprep.subr.mxu0 0.0
    %196 = vmatpush2.msra.mxu0 0.0
    %197 = vmatprep.mubr.f32.mxu0 0.0
    %198 = vmatmul.mubr.f32.gmra.mxu0 %v131
    %v199 = vpop.f32.mrf.mxu0
    %v200 = vadd.f32 %v128, %v199
    %v201 = vpop.f32.mrf.mxu0
    %202 = vdwg.mxu0
    %vm203 = vcmask 31744
    %204 = vst.msk [vmem:[%s5] sm:$0xff] %vm203, %v200
    // Predicated region
    $region26: #{tpu_custom_call.1} parent=1 // pred_check
      _
    $region27: #{tpu_custom_call.1} parent=1 // pred_check_branch
      %206 = sbr.rel (0) target = $region29
    $region28: #{tpu_custom_call.1} parent=1 // pred_region
      _
    $region29: #{tpu_custom_call.1} parent=1 // pred_fallthru
      _
    // Predicated region
    $region30: #{tpu_custom_call.1} parent=1 // pred_check
      _
    $region31: #{tpu_custom_call.1} parent=1 // pred_check_branch
      %208 = sbr.rel (0) target = $region33
    $region32: #{tpu_custom_call.1} parent=1 // pred_region
      _
    $region33: #{tpu_custom_call.1} parent=1 // pred_fallthru
      _
    %209 = vsyncpa [#allocation3], 1

</llo_original>
